<compile_context>
chip_gen: v6e
topology: v6e:2x2x1
jax: 0.10.0
libtpu: 0.0.40
codegen_flags: <defaults>
</compile_context>

<pallas_src>
import jax
import jax.numpy as jnp
import numpy as np
from jax import lax
from jax.experimental import pallas as pl
from jax.experimental.pallas import tpu as pltpu  # noqa: F401  (TPU backend)

TEMPERATURE = 0.03
NEGATIVE_W = 0.8
_NORM_EPS = 1e-12     # matches torch F.normalize default eps
_NEG_BIG = -1e30      # additive mask: kills cross-modal columns inside exp()


def _make_kernel(batch_size: int, temperature: float, negative_w: float):
    B = batch_size
    scale = negative_w / temperature            # folded once at trace time
    sqrt_scale = float(np.sqrt(scale))          # folded into the normalization
    log2 = float(np.log(2.0))
    eps_sq = _NORM_EPS * _NORM_EPS

    def kernel(vid_ref, txt_ref, w_ref, b_ref, out_ref):
        # ---- align_dim: Linear(video_dim -> text_dim) on the MXU ----
        v = jnp.dot(vid_ref[...], w_ref[...],
                    preferred_element_type=jnp.float32) + b_ref[...]   # (B, Dt)
        t = txt_ref[...].astype(jnp.float32)                           # (B, Dt)

        # ---- stack modalities: every later pass runs once on (2B, Dt) ----
        x = jnp.concatenate([v, t], axis=0)                            # (2B, Dt)

        # ---- L2-normalize rows, with sqrt(negative_w/temperature) folded in.
        #      torch: x / max(||x||, eps)  ==  x * rsqrt(max(||x||^2, eps^2))
        ssq = jnp.sum(x * x, axis=1, keepdims=True)                    # (2B, 1)
        x = x * (lax.rsqrt(jnp.maximum(ssq, eps_sq)) * sqrt_scale)

        # ---- one (2B, 2B) similarity, already scaled by negative_w/temp ----
        sim = lax.dot_general(x, x, (((1,), (1,)), ((), ())),
                              preferred_element_type=jnp.float32)      # (2B, 2B)

        # ---- block-diagonal masking:
        #        same-modality off-diagonal -> scaled similarity
        #        diagonal                   -> exactly 0  (positive_mask)
        #        cross-modality block       -> -1e30      (excluded from softmax)
        row = lax.broadcasted_iota(jnp.int32, (2 * B, 2 * B), 0)
        col = lax.broadcasted_iota(jnp.int32, (2 * B, 2 * B), 1)
        row_vid = row < B
        col_vid = col < B
        same_block = (row_vid & col_vid) | ((~row_vid) & (~col_vid))
        off_diag = row != col
        z = jnp.where(same_block, jnp.where(off_diag, sim, 0.0), _NEG_BIG)

        # ---- masked softmax-CE, simplified: diag(z) == 0, so the masked
        #      numerator of softmax(cat([z, z], 1)) is exp(0 - m) and
        #        loss_row = m + log(2) + log(sum_j exp(z_j - m))
        m = jnp.max(z, axis=1, keepdims=True)                          # (2B,1) >= 0
        denom = jnp.sum(jnp.exp(z - m), axis=1, keepdims=True)         # (2B, 1)
        loss_rows = m + log2 + jnp.log(denom)                          # (2B, 1)

        # (loss_i.mean() + loss_t.mean()) / 2  ==  sum over all 2B rows / (2B)
        out_ref[...] = jnp.sum(loss_rows, axis=0, keepdims=True) * (1.0 / (2.0 * B))

    return kernel


def intra_modality_cl(video_features, text_features, w, b,
                      temperature=TEMPERATURE, negative_w=NEGATIVE_W):
    """Pallas TPU implementation of IntraModalityCL.forward -> scalar loss."""
    B, Dv = video_features.shape
    Bt, Dt = text_features.shape
    assert B == Bt and w.shape == (Dv, Dt) and b.shape == (Dt,)
    b2d = b.reshape(1, Dt)

    kernel = _make_kernel(B, float(temperature), float(negative_w))

    # Advisory cost so XLA knows this custom call is tiny and can pack it.
    flops = (2 * B * Dv * Dt                    # projection
             + 2 * (2 * B) * (2 * B) * Dt       # stacked similarity
             + 12 * (2 * B) * (2 * B))          # elementwise epilogue
    transcendentals = (2 * B) * (2 * B) + 3 * (2 * B)   # exp + rsqrt/log per row
    bytes_accessed = 4 * (B * Dv + B * Dt + Dv * Dt + Dt + 1)
    cost = pl.CostEstimate(flops=flops, transcendentals=transcendentals,
                           bytes_accessed=bytes_accessed)

    out = pl.pallas_call(
        kernel,
        out_shape=jax.ShapeDtypeStruct((1, 1), jnp.float32),
        in_specs=[
            pl.BlockSpec((B, Dv), lambda: (0, 0)),
            pl.BlockSpec((B, Dt), lambda: (0, 0)),
            pl.BlockSpec((Dv, Dt), lambda: (0, 0)),
            pl.BlockSpec((1, Dt), lambda: (0, 0)),
        ],
        out_specs=pl.BlockSpec((1, 1), lambda: (0, 0)),
        cost_estimate=cost,
    )(video_features, text_features, w, b2d)
    return out[0, 0]


def _reference(video_features, text_features, w, b,
               temperature=TEMPERATURE, negative_w=NEGATIVE_W):
    """Pure-JAX reference that mirrors the torch code literally."""
    B = video_features.shape[0]
    v = video_features @ w + b
    v = v / jnp.maximum(jnp.linalg.norm(v, axis=1, keepdims=True), _NORM_EPS)
    t = text_features / jnp.maximum(
        jnp.linalg.norm(text_features, axis=1, keepdims=True), _NORM_EPS)
    sim_v = (v @ v.T) / temperature
    sim_t = (t @ t.T) / temperature
    pos_mask = 1.0 - jnp.eye(B)
    neg_v = sim_v * pos_mask
    neg_t = sim_t * pos_mask
    vid_logits = jnp.concatenate([negative_w * neg_v, negative_w * neg_v], axis=1)
    txt_logits = jnp.concatenate([negative_w * neg_t, negative_w * neg_t], axis=1)
    mask = jnp.concatenate([jnp.eye(B), jnp.zeros((B, B))], axis=1)

    def compute_loss(logits, m):
        return -jnp.log((jax.nn.softmax(logits, axis=1) * m).sum(1))

    loss_i = compute_loss(vid_logits, mask)
    loss_t = compute_loss(txt_logits, mask)
    return (loss_i.mean() + loss_t.mean()) / 2.0


if __name__ == "__main__":
    B, video_dim, text_dim = 8, 32, 16

    key = jax.random.PRNGKey(0)
    k_vid, k_txt, k_w, k_b = jax.random.split(key, 4)

    video = jax.random.normal(k_vid, (B, video_dim), dtype=jnp.float32)
    text = jax.random.normal(k_txt, (B, text_dim), dtype=jnp.float32)

    # Deterministic "align_dim" Linear(video_dim, text_dim) params
    # (torch stores weight as (text_dim, video_dim); we keep its transpose).
    bound = 1.0 / np.sqrt(video_dim)
    w = jax.random.uniform(k_w, (video_dim, text_dim), jnp.float32, -bound, bound)
    b = jax.random.uniform(k_b, (text_dim,), jnp.float32, -bound, bound)
    # NOTE: logit_scale / CrossEntropyLoss exist in __init__ but are unused in forward.

    loss = intra_modality_cl(video, text, w, b)
    loss = jax.block_until_ready(loss)

    ref = _reference(video, text, w, b)
    assert np.allclose(np.asarray(loss), np.asarray(ref), rtol=1e-5, atol=1e-4), (
        loss, ref)

    print("KERNEL_OK")
</pallas_src>

<mosaic_0001>
module attributes {stable_mosaic.version = 11 : i64} {
  func.func @kernel(%arg0: memref<8x32xf32, #tpu.memory_space<vmem>>, %arg1: memref<8x16xf32, #tpu.memory_space<vmem>>, %arg2: memref<32x16xf32, #tpu.memory_space<vmem>>, %arg3: memref<1x16xf32, #tpu.memory_space<vmem>>, %arg4: memref<1x1xf32, #tpu.memory_space<vmem>>) attributes {dimension_semantics = [], scalar_prefetch = 0 : i64, scratch_operands = 0 : i64, tpu.core_type = #tpu.core_type<tc>} {
    %c0 = arith.constant 0 : index
    %c0_0 = arith.constant 0 : index
    %0 = vector.load %arg0[%c0, %c0_0] : memref<8x32xf32, #tpu.memory_space<vmem>>, vector<8x32xf32>
    %c0_1 = arith.constant 0 : index
    %c0_2 = arith.constant 0 : index
    %1 = vector.load %arg2[%c0_1, %c0_2] : memref<32x16xf32, #tpu.memory_space<vmem>>, vector<32x16xf32>
    %cst = arith.constant dense<0.000000e+00> : vector<8x16xf32>
    %2 = tpu.matmul %0, %1, %cst {dimension_numbers = #tpu.dot_dimension_numbers<[1], [0], [0], [1], [0, 0, 1, 1], [], []>} : vector<8x32xf32>, vector<32x16xf32>, vector<8x16xf32> -> vector<8x16xf32>
    %c0_3 = arith.constant 0 : index
    %c0_4 = arith.constant 0 : index
    %3 = vector.load %arg3[%c0_3, %c0_4] : memref<1x16xf32, #tpu.memory_space<vmem>>, vector<1x16xf32>
    %4 = vector.broadcast %3 : vector<1x16xf32> to vector<8x16xf32>
    %5 = arith.addf %2, %4 : vector<8x16xf32>
    %c0_5 = arith.constant 0 : index
    %c0_6 = arith.constant 0 : index
    %6 = vector.load %arg1[%c0_5, %c0_6] : memref<8x16xf32, #tpu.memory_space<vmem>>, vector<8x16xf32>
    %7 = tpu.concatenate %5, %6 in 0 : vector<8x16xf32>, vector<8x16xf32> -> vector<16x16xf32>
    %8 = arith.mulf %7, %7 : vector<16x16xf32>
    %cst_7 = arith.constant dense<0.000000e+00> : vector<16xf32>
    %9 = vector.multi_reduction <add>, %8, %cst_7 [1] : vector<16x16xf32> to vector<16xf32>
    %10 = vector.shape_cast %9 : vector<16xf32> to vector<16x1xf32>
    %cst_8 = arith.constant 1.000000e-24 : f32
    %11 = vector.broadcast %cst_8 : f32 to vector<16x1xf32>
    %12 = arith.maximumf %10, %11 : vector<16x1xf32>
    %13 = math.rsqrt %12 : vector<16x1xf32>
    %cst_9 = arith.constant 5.16397762 : f32
    %14 = vector.broadcast %cst_9 : f32 to vector<16x1xf32>
    %15 = arith.mulf %13, %14 : vector<16x1xf32>
    %16 = vector.broadcast %15 : vector<16x1xf32> to vector<16x16xf32>
    %17 = arith.mulf %7, %16 : vector<16x16xf32>
    %cst_10 = arith.constant dense<0.000000e+00> : vector<16x16xf32>
    %18 = tpu.matmul %17, %17, %cst_10 {dimension_numbers = #tpu.dot_dimension_numbers<[1], [1], [0], [0], [0, 0, 1, 0], [], []>} : vector<16x16xf32>, vector<16x16xf32>, vector<16x16xf32> -> vector<16x16xf32>
    %19 = tpu.iota {dimensions = array<i32: 0>} : vector<16x16xi32>
    %20 = tpu.iota {dimensions = array<i32: 1>} : vector<16x16xi32>
    %c8_i32 = arith.constant 8 : i32
    %21 = vector.broadcast %c8_i32 : i32 to vector<16x16xi32>
    %22 = arith.cmpi slt, %19, %21 : vector<16x16xi32>
    %c8_i32_11 = arith.constant 8 : i32
    %23 = vector.broadcast %c8_i32_11 : i32 to vector<16x16xi32>
    %24 = arith.cmpi slt, %20, %23 : vector<16x16xi32>
    %25 = arith.andi %22, %24 : vector<16x16xi1>
    %cst_12 = arith.constant dense<true> : vector<16x16xi1>
    %26 = arith.xori %22, %cst_12 : vector<16x16xi1>
    %cst_13 = arith.constant dense<true> : vector<16x16xi1>
    %27 = arith.xori %24, %cst_13 : vector<16x16xi1>
    %28 = arith.andi %26, %27 : vector<16x16xi1>
    %29 = arith.ori %25, %28 : vector<16x16xi1>
    %30 = arith.cmpi ne, %19, %20 : vector<16x16xi32>
    %cst_14 = arith.constant 0.000000e+00 : f32
    %31 = vector.broadcast %cst_14 : f32 to vector<16x16xf32>
    %32 = arith.select %30, %18, %31 : vector<16x16xi1>, vector<16x16xf32>
    %cst_15 = arith.constant -1.000000e+30 : f32
    %33 = vector.broadcast %cst_15 : f32 to vector<16x16xf32>
    %34 = arith.select %29, %32, %33 : vector<16x16xi1>, vector<16x16xf32>
    %cst_16 = arith.constant dense<0xFF800000> : vector<16xf32>
    %35 = vector.multi_reduction <maximumf>, %34, %cst_16 [1] : vector<16x16xf32> to vector<16xf32>
    %36 = vector.shape_cast %35 : vector<16xf32> to vector<16x1xf32>
    %37 = vector.broadcast %36 : vector<16x1xf32> to vector<16x16xf32>
    %38 = arith.subf %34, %37 : vector<16x16xf32>
    %39 = math.exp %38 : vector<16x16xf32>
    %cst_17 = arith.constant dense<0.000000e+00> : vector<16xf32>
    %40 = vector.multi_reduction <add>, %39, %cst_17 [1] : vector<16x16xf32> to vector<16xf32>
    %41 = vector.shape_cast %40 : vector<16xf32> to vector<16x1xf32>
    %cst_18 = arith.constant 0.693147182 : f32
    %42 = vector.broadcast %cst_18 : f32 to vector<16x1xf32>
    %43 = arith.addf %36, %42 : vector<16x1xf32>
    %44 = math.log %41 : vector<16x1xf32>
    %45 = arith.addf %43, %44 : vector<16x1xf32>
    %cst_19 = arith.constant dense<0.000000e+00> : vector<1xf32>
    %46 = vector.multi_reduction <add>, %45, %cst_19 [0] : vector<16x1xf32> to vector<1xf32>
    %47 = vector.shape_cast %46 : vector<1xf32> to vector<1x1xf32>
    %cst_20 = arith.constant 6.250000e-02 : f32
    %48 = vector.broadcast %cst_20 : f32 to vector<1x1xf32>
    %49 = arith.mulf %47, %48 : vector<1x1xf32>
    %c0_21 = arith.constant 0 : index
    %c0_22 = arith.constant 0 : index
    %50 = vector.load %arg4[%c0_21, %c0_22] : memref<1x1xf32, #tpu.memory_space<vmem>>, vector<1x1xf32>
    tpu.vector_store %arg4[%c0_21, %c0_22], %49 {strides = array<i32>} : memref<1x1xf32, #tpu.memory_space<vmem>>, vector<1x1xf32>,
    return
  }
}

</mosaic_0001>

<llo_original>
// kernel: tpu_custom_call.1
$region0: #{tpu_custom_call.1}
  #allocation0 [shape = 'u32[]', space=smem, size = 0x4, offset = 0x4, fixed_abs, tag = 'smem constant byte address 0x4 - core index']
  #allocation1 [shape = 'u32[144,128]{1,0:T(1,128)}', space=vmem, size = 0x12000, scoped, tag = 'internal scratch']
  %s0 = inlined_call_operand.vmem [shape: f32[8,32], index: 0, kind: input, shape index: {}]
  %s1 = inlined_call_operand.vmem [shape: f32[8,16], index: 1, kind: input, shape index: {}]
  %s2 = inlined_call_operand.vmem [shape: f32[32,16], index: 2, kind: input, shape index: {}]
  %s3 = inlined_call_operand.vmem [shape: f32[1,16], index: 3, kind: input, shape index: {}]
  %s4 = inlined_call_operand.hbm [shape: f32[1,1], index: 4, kind: output, shape index: {}]
  %s5 = sld [smem:[#allocation0]]
  $region26: #{tpu_custom_call.1} parent=0
    _
  %s7 = ssub.s32 1, %s5
  %s8 = scalar_select 0, %s7, %s5
  $region1: #{tpu_custom_call.1} parent=0
    #allocation2 [shape = 'u8[512]{0}', space=vmem, size = 0x400, scoped, tag = 'output window, operand 0, single buffered']
    #allocation3 [shape = 's32[1]{0}', space=sflag, size = 0x4, scoped, tag = 'scoped memory for tpu_custom_call.1']
    %9 = vsyncpa [#allocation3], 0
    // Predicated region
    $region2: #{tpu_custom_call.1} parent=1 // pred_check
      _
    $region3: #{tpu_custom_call.1} parent=1 // pred_check_branch
      %11 = sbr.rel (0) target = $region5
    $region4: #{tpu_custom_call.1} parent=1 // pred_region
      _
    $region5: #{tpu_custom_call.1} parent=1 // pred_fallthru
      _
    // Predicated region
    $region6: #{tpu_custom_call.1} parent=1 // pred_check
      _
    $region7: #{tpu_custom_call.1} parent=1 // pred_check_branch
      %13 = sbr.rel (0) target = $region9
    $region8: #{tpu_custom_call.1} parent=1 // pred_region
      _
    $region9: #{tpu_custom_call.1} parent=1 // pred_fallthru
      _
    // Predicated region
    $region10: #{tpu_custom_call.1} parent=1 // pred_check
      _
    $region11: #{tpu_custom_call.1} parent=1 // pred_check_branch
      %15 = sbr.rel (0) target = $region13
    $region12: #{tpu_custom_call.1} parent=1 // pred_region
      _
    $region13: #{tpu_custom_call.1} parent=1 // pred_fallthru
      _
    // Predicated region
    $region14: #{tpu_custom_call.1} parent=1 // pred_check
      _
    $region15: #{tpu_custom_call.1} parent=1 // pred_check_branch
      %17 = sbr.rel (0) target = $region17
    $region16: #{tpu_custom_call.1} parent=1 // pred_region
      _
    $region17: #{tpu_custom_call.1} parent=1 // pred_fallthru
      _
    %v18 = vld [vmem:[%s0] sm:$0xff]
    %v19 = vld [vmem:[%s2] sm:$0xff]
    %v20 = vld [vmem:[%s2 + $0x8] sm:$0xff]
    %v21 = vld [vmem:[%s2 + $0x10] sm:$0xff]
    %v22 = vld [vmem:[%s2 + $0x18] sm:$0xff]
    %v23 = vld [vmem:[%s3] sm:$0x1]
    %v25 = vlaneseq
    %v26 = vshrl.u32 %v25, 7
    %v27 = vsub.s32 0, %v26
    %v28 = vrot.slane %v23, %v27
    %vm30 = vcmask 261120
    %v32 = vsel %vm30, %v18, 0
    %34 = vmatprep.subr.mxu0 0.0
    %35 = vmatpush1.msra.mxu0 0.0
    %36 = vmatprep.subr.mxu0 0.0
    %37 = vmatpush1.msra.mxu0 0.0
    %38 = vmatprep.subr.mxu0 0.0
    %39 = vmatpush1.msra.mxu0 0.0
    %40 = vmatprep.subr.mxu0 0.0
    %41 = vmatpush1.msra.mxu0 0.0
    %42 = vmatprep.subr.mxu0 0.0
    %43 = vmatpush1.msra.mxu0 0.0
    %44 = vmatprep.subr.mxu0 0.0
    %45 = vmatpush1.msra.mxu0 0.0
    %46 = vmatprep.subr.mxu0 0.0
    %47 = vmatpush1.msra.mxu0 0.0
    %48 = vmatprep.subr.mxu0 0.0
    %49 = vmatpush1.msra.mxu0 0.0
    %50 = vmatprep.subr.mxu0 0.0
    %51 = vmatpush1.msra.mxu0 0.0
    %52 = vmatprep.subr.mxu0 0.0
    %53 = vmatpush1.msra.mxu0 0.0
    %54 = vmatprep.subr.mxu0 0.0
    %55 = vmatpush1.msra.mxu0 0.0
    %56 = vmatprep.subr.mxu0 0.0
    %57 = vmatpush1.msra.mxu0 0.0
    %58 = vmatprep.subr.mxu0 0.0
    %59 = vmatpush1.msra.mxu0 %v22
    %60 = vmatprep.subr.mxu0 0.0
    %61 = vmatpush1.msra.mxu0 %v21
    %62 = vmatprep.subr.mxu0 0.0
    %63 = vmatpush1.msra.mxu0 %v20
    %64 = vmatprep.subr.mxu0 0.0
    %65 = vmatpush1.msra.mxu0 %v19
    %66 = vmatprep.subr.mxu0 0.0
    %67 = vmatpush2.msra.mxu0 0.0
    %68 = vmatprep.subr.mxu0 0.0
    %69 = vmatpush2.msra.mxu0 0.0
    %70 = vmatprep.subr.mxu0 0.0
    %71 = vmatpush2.msra.mxu0 0.0
    %72 = vmatprep.subr.mxu0 0.0
    %73 = vmatpush2.msra.mxu0 0.0
    %74 = vmatprep.subr.mxu0 0.0
    %75 = vmatpush2.msra.mxu0 0.0
    %76 = vmatprep.subr.mxu0 0.0
    %77 = vmatpush2.msra.mxu0 0.0
    %78 = vmatprep.subr.mxu0 0.0
    %79 = vmatpush2.msra.mxu0 0.0
    %80 = vmatprep.subr.mxu0 0.0
    %81 = vmatpush2.msra.mxu0 0.0
    %82 = vmatprep.subr.mxu0 0.0
    %83 = vmatpush2.msra.mxu0 0.0
    %84 = vmatprep.subr.mxu0 0.0
    %85 = vmatpush2.msra.mxu0 0.0
    %86 = vmatprep.subr.mxu0 0.0
    %87 = vmatpush2.msra.mxu0 0.0
    %88 = vmatprep.subr.mxu0 0.0
    %89 = vmatpush2.msra.mxu0 0.0
    %90 = vmatprep.subr.mxu0 0.0
    %91 = vmatpush2.msra.mxu0 0.0
    %92 = vmatprep.subr.mxu0 0.0
    %93 = vmatpush2.msra.mxu0 0.0
    %94 = vmatprep.subr.mxu0 0.0
    %95 = vmatpush2.msra.mxu0 0.0
    %96 = vmatprep.subr.mxu0 0.0
    %97 = vmatpush2.msra.mxu0 0.0
    %98 = vmatprep.mubr.f32.mxu0 0.0
    %99 = vmatmul.mubr.f32.gmra.mxu0 %v32
    %v100 = vpop.f32.mrf.mxu0
    %v101 = vadd.f32 %v28, %v100
    %v102 = vpop.f32.mrf.mxu0
    %103 = vdwg.mxu0
    %v104 = vld [vmem:[%s1] sm:$0xff]
    %v105 = vmul.f32 %v101, %v101
    %v106 = vmul.f32 %v104, %v104
    %vm107 = vcmask 130048
    %v108 = vsel %vm107, %v105, 0.0
    %109 = vadd.xlane.f32.xlu0 %v108
    %v110 = vpop.xlane.xlu0 %109
    %v111 = vsel %vm107, %v106, 0.0
    %112 = vadd.xlane.f32.xlu0 %v111
    %v113 = vpop.xlane.xlu0 %112
    %v114 = vmax.f32 %v110, 1e-24
    %v115 = vmax.f32 %v113, 1e-24
    %v116 = vrsqrt.pop %v114
    %v117 = vrsqrt.pop %v115
    %v118 = vmul.f32 %v116, 5.1639776
    %v119 = vmul.f32 %v117, 5.1639776
    %v120 = vmul.f32 %v101, %v118
    %v121 = vmul.f32 %v104, %v119
    %v123 = vsel %vm107, %v120, 0
    %v126 = vsel %vm107, %v121, 0
    %128 = vmatprep.subr.mxu0 0.0
    %129 = vmatpush1.xpose.msra.mxu0 0.0
    %130 = vmatprep.subr.mxu0 0.0
    %131 = vmatpush1.xpose.msra.mxu0 0.0
    %132 = vmatprep.subr.mxu0 0.0
    %133 = vmatpush1.xpose.msra.mxu0 0.0
    %134 = vmatprep.subr.mxu0 0.0
    %135 = vmatpush1.xpose.msra.mxu0 0.0
    %136 = vmatprep.subr.mxu0 0.0
    %137 = vmatpush1.xpose.msra.mxu0 0.0
    %138 = vmatprep.subr.mxu0 0.0
    %139 = vmatpush1.xpose.msra.mxu0 0.0
    %140 = vmatprep.subr.mxu0 0.0
    %141 = vmatpush1.xpose.msra.mxu0 0.0
    %142 = vmatprep.subr.mxu0 0.0
    %143 = vmatpush1.xpose.msra.mxu0 0.0
    %144 = vmatprep.subr.mxu0 0.0
    %145 = vmatpush1.xpose.msra.mxu0 0.0
    %146 = vmatprep.subr.mxu0 0.0
    %147 = vmatpush1.xpose.msra.mxu0 0.0
    %148 = vmatprep.subr.mxu0 0.0
    %149 = vmatpush1.xpose.msra.mxu0 0.0
    %150 = vmatprep.subr.mxu0 0.0
    %151 = vmatpush1.xpose.msra.mxu0 0.0
    %152 = vmatprep.subr.mxu0 0.0
    %153 = vmatpush1.xpose.msra.mxu0 0.0
    %154 = vmatprep.subr.mxu0 0.0
    %155 = vmatpush1.xpose.msra.mxu0 0.0
    %156 = vmatprep.subr.mxu0 0.0
    %157 = vmatpush1.xpose.msra.mxu0 %v126
    %158 = vmatprep.subr.mxu0 0.0
    %159 = vmatpush1.xpose.msra.mxu0 %v123
    %160 = vmatprep.subr.mxu0 0.0
    %161 = vmatpush2.xpose.msra.mxu0 0.0
    %162 = vmatprep.subr.mxu0 0.0
    %163 = vmatpush2.xpose.msra.mxu0 0.0
    %164 = vmatprep.subr.mxu0 0.0
    %165 = vmatpush2.xpose.msra.mxu0 0.0
    %166 = vmatprep.subr.mxu0 0.0
    %167 = vmatpush2.xpose.msra.mxu0 0.0
    %168 = vmatprep.subr.mxu0 0.0
    %169 = vmatpush2.xpose.msra.mxu0 0.0
    %170 = vmatprep.subr.mxu0 0.0
    %171 = vmatpush2.xpose.msra.mxu0 0.0
    %172 = vmatprep.subr.mxu0 0.0
    %173 = vmatpush2.xpose.msra.mxu0 0.0
    %174 = vmatprep.subr.mxu0 0.0
    %175 = vmatpush2.xpose.msra.mxu0 0.0
    %176 = vmatprep.subr.mxu0 0.0
    %177 = vmatpush2.xpose.msra.mxu0 0.0
    %178 = vmatprep.subr.mxu0 0.0
    %179 = vmatpush2.xpose.msra.mxu0 0.0
    %180 = vmatprep.subr.mxu0 0.0
    %181 = vmatpush2.xpose.msra.mxu0 0.0
    %182 = vmatprep.subr.mxu0 0.0
    %183 = vmatpush2.xpose.msra.mxu0 0.0
    %184 = vmatprep.subr.mxu0 0.0
    %185 = vmatpush2.xpose.msra.mxu0 0.0
    %186 = vmatprep.subr.mxu0 0.0
    %187 = vmatpush2.xpose.msra.mxu0 0.0
    %188 = vmatprep.subr.mxu0 0.0
    %189 = vmatpush2.xpose.msra.mxu0 0.0
    %190 = vmatprep.subr.mxu0 0.0
    %191 = vmatpush2.xpose.msra.mxu0 0.0
    %192 = vmatprep.mubr.f32.mxu0 0.0
    %193 = vmatmul.mubr.f32.gmra.mxu0 %v123
    %v194 = vpop.f32.mrf.mxu0
    %v195 = vadd.f32 0.0, %v194
    %v196 = vpop.f32.mrf.mxu0
    %197 = vmatprep.mubr.f32.mxu0 0.0
    %198 = vmatmul.mubr.f32.gmra.mxu0 %v126
    %v199 = vpop.f32.mrf.mxu0
    %v200 = vadd.f32 0.0, %v199
    %v201 = vpop.f32.mrf.mxu0
    %202 = vdwg.mxu0
    %v203 = vlaneseq
    %v204 = vshrl.u32 %v203, 7
    %v205 = vadd.s32 %v204, 8
    %v206 = vlaneseq
    %v207 = vand.u32 %v206, 127
    %vm208 = vcmp.lt.s32.totalorder %v204, 8
    %vm209 = vcmp.lt.s32.totalorder %v205, 8
    %vm210 = vcmp.lt.s32.totalorder %v207, 8
    %vm211 = vmand %vm208, %vm210
    %vm212 = vmand %vm209, %vm210
    %vm213 = vmxor %vm208, 1
    %vm214 = vmxor %vm209, 1
    %vm215 = vmxor %vm210, 1
    %vm216 = vmand %vm213, %vm215
    %vm217 = vmand %vm214, %vm215
    %vm218 = vmor %vm211, %vm216
    %vm219 = vmor %vm212, %vm217
    %vm220 = vcmp.ne.s32.totalorder %v204, %v207
    %vm221 = vcmp.ne.s32.totalorder %v205, %v207
    %v222 = vsel %vm220, %v195, 0.0
    %v223 = vsel %vm221, %v200, 0.0
    %v224 = vsel %vm218, %v222, -1e+30
    %v225 = vsel %vm219, %v223, -1e+30
    %v226 = vsel %vm107, %v224, -inf
    %227 = vmax.xlane.f32.xlu0 %v226
    %v228 = vpop.xlane.xlu0 %227
    %v229 = vsel %vm107, %v225, -inf
    %230 = vmax.xlane.f32.xlu0 %v229
    %v231 = vpop.xlane.xlu0 %230
    %v232 = vsub.f32 %v224, %v228
    %v233 = vsub.f32 %v225, %v231
    %v234 = vmul.f32 %v232, 1.442695
    %v235 = vpow.pop %v234
    %v236 = vmul.f32 %v233, 1.442695
    %v237 = vpow.pop %v236
    %v238 = vsel %vm107, %v235, 0.0
    %239 = vadd.xlane.f32.xlu0 %v238
    %v240 = vpop.xlane.xlu0 %239
    %v241 = vsel %vm107, %v237, 0.0
    %242 = vadd.xlane.f32.xlu0 %v241
    %v243 = vpop.xlane.xlu0 %242
    %v244 = vadd.f32 %v228, 0.6931472
    %v245 = vadd.f32 %v231, 0.6931472
    %v246 = vlog2.pop %v240
    %v247 = vmul.f32 %v246, 0.6931472
    %v248 = vlog2.pop %v243
    %v249 = vmul.f32 %v248, 0.6931472
    %v250 = vadd.f32 %v244, %v247
    %v251 = vadd.f32 %v245, %v249
    %v252 = vadd.f32 %v250, %v251
    %v253 = vrot.slane %v252, 4
    %v254 = vadd.f32 %v252, %v253
    %v255 = vrot.slane %v254, 2
    %v256 = vadd.f32 %v254, %v255
    %v257 = vrot.slane %v256, 1
    %v258 = vadd.f32 %v256, %v257
    %v259 = vmul.f32 %v258, 0.0625
    %vm260 = vcmask 0
    %261 = vst.msk [vmem:[#allocation2] sm:$0x1] %vm260, %v259
    // Predicated region
    $region18: #{tpu_custom_call.1} parent=1 // pred_check
      _
    $region19: #{tpu_custom_call.1} parent=1 // pred_check_branch
      %263 = sbr.rel (0) target = $region21
    $region20: #{tpu_custom_call.1} parent=1 // pred_region
      %s265 = ssub.s32 16, 16
      %266 = vsyncadd [#allocation3], %s265
      %s268 = sshll.u32 [#allocation2], 4
      %s269 = int_to_ptr.vmem [resolvable:$true] %s268
      %271 = dma.vmem_to_hbm [thread:$0]  %s269, 16, %s4, [#allocation3]
    $region21: #{tpu_custom_call.1} parent=1 // pred_fallthru
      _
    // Predicated region
    $region22: #{tpu_custom_call.1} parent=1 // pred_check
      _
    $region23: #{tpu_custom_call.1} parent=1 // pred_check_branch
      %273 = sbr.rel (0) target = $region25
    $region24: #{tpu_custom_call.1} parent=1 // pred_region
      %274 = dma.done [#allocation3], 16
    $region25: #{tpu_custom_call.1} parent=1 // pred_fallthru
      _
    %275 = vsyncpa [#allocation3], 1

</llo_original>
